<compile_context>
chip_gen: v5e
topology: v5e:2x2
jax: 0.10.0
libtpu: 0.0.40
codegen_flags: <defaults>
</compile_context>

<pallas_src>
import functools

import jax
import jax.numpy as jnp
from jax.experimental import pallas as pl
from jax.experimental.pallas import tpu as pltpu


def _round_up(x, m):
    return ((x + m - 1) // m) * m


def _choose_batch_tile(B, *, sublane=16, max_tile=1024, min_grid=2):
    """Pick an MXU/sublane-friendly batch tile.

    - multiple of 16 rows (native bf16 sublane packing)
    - aim for an even grid of >= `min_grid` steps (v7x has 2 TensorCores)
    - cap the tile at `max_tile` rows so per-step VMEM stays tiny and v5e/v6e
      (single TC, sequential grid) still see few steps for medium batches.
    """
    B_pad = _round_up(B, sublane)
    if B_pad <= sublane * min_grid:
        return B_pad                       # tiny batch: one tile, one step
    tb = _round_up(pl.cdiv(B_pad, min_grid), sublane)
    return min(tb, max_tile)


def mlp_policy_kernel(x_ref, w1_ref, b1_ref, w2_ref, b2_ref, w3_ref, b3_ref, o_ref,
                      *, activation):
    """Fused MLP: act(x@W1+b1) -> act(.@W2+b2) -> .@W3+b3 (f32 accumulation)."""
    if activation == "tanh":
        act = jnp.tanh
    elif activation == "relu":
        act = lambda v: jnp.maximum(v, 0.0)
    elif activation == "sigmoid":
        act = jax.nn.sigmoid
    else:
        raise ValueError(f"unsupported activation: {activation}")

    # x arrives as f32; cast to the MXU compute dtype in-kernel (free VPU work).
    x = x_ref[...].astype(w1_ref.dtype)                               # (tb, S) bf16
    h = act(jnp.dot(x, w1_ref[...],
                    preferred_element_type=jnp.float32) + b1_ref[...])  # (tb, H1) f32
    h = h.astype(w2_ref.dtype)                                        # bf16 for MXU
    h = act(jnp.dot(h, w2_ref[...],
                    preferred_element_type=jnp.float32) + b2_ref[...])  # (tb, H2) f32
    h = h.astype(w3_ref.dtype)
    out = jnp.dot(h, w3_ref[...],
                  preferred_element_type=jnp.float32) + b3_ref[...]   # (tb, A) f32
    o_ref[...] = out.astype(o_ref.dtype)


def policy_forward(x, params, *, batch_tile=None, activation="tanh",
                   compute_dtype=jnp.bfloat16, max_tile=1024):
    """Pallas TPU forward pass of the Policy MLP.

    x:      (B, state_dim) float32
    params: dict with w1 (S,H1), b1 (1,H1), w2 (H1,H2), b2 (1,H2), w3 (H2,A), b3 (1,A)
    returns (B, A) float32 action mean
    """
    B, S = x.shape
    H1 = params["w1"].shape[1]
    H2 = params["w2"].shape[1]
    A = params["w3"].shape[1]

    # ---- tiling: 16-row-aligned batch tile, even grid when possible ----------
    tb = batch_tile if batch_tile is not None else _choose_batch_tile(
        B, max_tile=max_tile)
    tb = _round_up(min(tb, _round_up(B, 16)), 16)
    B_pad = _round_up(B, tb)

    # x stays f32; only zero-pad ragged batches (no wrapper-side dtype cast).
    x_p = x if B_pad == B else jnp.pad(x, ((0, B_pad - B), (0, 0)))

    # Weights to compute dtype (tiny, one-off); biases stay f32.
    w1 = params["w1"].astype(compute_dtype)
    w2 = params["w2"].astype(compute_dtype)
    w3 = params["w3"].astype(compute_dtype)
    b1 = params["b1"].astype(jnp.float32)
    b2 = params["b2"].astype(jnp.float32)
    b3 = params["b3"].astype(jnp.float32)

    grid = (B_pad // tb,)

    # x / out tiled over batch; weights & biases replicated (constant index_map,
    # so they stay resident in VMEM across the whole grid).
    in_specs = [
        pl.BlockSpec((tb, S), lambda i: (i, 0)),      # x (f32, cast in-kernel)
        pl.BlockSpec((S, H1), lambda i: (0, 0)),      # w1
        pl.BlockSpec((1, H1), lambda i: (0, 0)),      # b1
        pl.BlockSpec((H1, H2), lambda i: (0, 0)),     # w2
        pl.BlockSpec((1, H2), lambda i: (0, 0)),      # b2
        pl.BlockSpec((H2, A), lambda i: (0, 0)),      # w3 (block == full dim A)
        pl.BlockSpec((1, A), lambda i: (0, 0)),       # b3
    ]
    out_specs = pl.BlockSpec((tb, A), lambda i: (i, 0))   # narrow f32 writeback

    kernel = functools.partial(mlp_policy_kernel, activation=activation)

    itemsize_w = jnp.dtype(compute_dtype).itemsize
    cost = pl.CostEstimate(
        flops=2 * B_pad * (S * H1 + H1 * H2 + H2 * A),
        transcendentals=B_pad * (H1 + H2) if activation != "relu" else 0,
        bytes_accessed=(B_pad * S * 4 + B_pad * A * 4
                        + (S * H1 + H1 * H2 + H2 * A) * itemsize_w
                        + (H1 + H2 + A) * 4),
    )

    out = pl.pallas_call(
        kernel,
        out_shape=jax.ShapeDtypeStruct((B_pad, A), jnp.float32),
        grid_spec=pltpu.PrefetchScalarGridSpec(
            num_scalar_prefetch=0,
            grid=grid,
            in_specs=in_specs,
            out_specs=out_specs,
        ),
        compiler_params=pltpu.CompilerParams(
            dimension_semantics=("parallel",),
        ),
        cost_estimate=cost,
    )(x_p, w1, b1, w2, b2, w3, b3)

    return out[:B] if B_pad != B else out


def init_policy_params(key, state_dim, action_dim, hidden_size=(128, 128)):
    """Matches torch.nn.Linear default init: U(-1/sqrt(fan_in), 1/sqrt(fan_in));
    then action_mean weight *= 0.1 and bias *= 0.0, as in the PyTorch module."""
    dims = [state_dim, *hidden_size, action_dim]
    params = {}
    keys = jax.random.split(key, 2 * (len(dims) - 1))
    for li in range(len(dims) - 1):
        fan_in, fan_out = dims[li], dims[li + 1]
        bound = 1.0 / jnp.sqrt(jnp.float32(fan_in))
        params[f"w{li + 1}"] = jax.random.uniform(
            keys[2 * li], (fan_in, fan_out), jnp.float32, -bound, bound)
        params[f"b{li + 1}"] = jax.random.uniform(
            keys[2 * li + 1], (1, fan_out), jnp.float32, -bound, bound)
    n = len(dims) - 1
    params[f"w{n}"] = params[f"w{n}"] * 0.1
    params[f"b{n}"] = params[f"b{n}"] * 0.0
    return params


def policy_ref(x, params):
    """Pure-JAX f32 reference for correctness checking."""
    h = jnp.tanh(x @ params["w1"] + params["b1"])
    h = jnp.tanh(h @ params["w2"] + params["b2"])
    return h @ params["w3"] + params["b3"]


if __name__ == "__main__":
    state_dim = 32
    action_dim = 8
    batch = 300  # not a multiple of 16: exercises padding; grid=2 uses both v7x TCs

    key = jax.random.PRNGKey(0)
    k_param, k_x = jax.random.split(key)
    params = init_policy_params(k_param, state_dim, action_dim, hidden_size=(128, 128))
    x = jax.random.normal(k_x, (batch, state_dim), jnp.float32)

    out = policy_forward(x, params)
    out = jax.block_until_ready(out)

    ref = policy_ref(x, params)
    assert out.shape == (batch, action_dim), out.shape
    # bf16 matmul inputs with f32 accumulation -> loosened tolerance vs f32 reference.
    max_err = float(jnp.max(jnp.abs(out - ref)))
    assert jnp.allclose(out, ref, atol=2e-2, rtol=2e-2), (
        f"mismatch vs JAX reference (max abs err {max_err})")

    print("KERNEL_OK")
</pallas_src>

<mosaic_0001>
module attributes {stable_mosaic.version = 11 : i64} {
  func.func @mlp_policy_kernel(%arg0: i32, %arg1: memref<160x32xf32, #tpu.memory_space<vmem>>, %arg2: memref<32x128xbf16, #tpu.memory_space<vmem>>, %arg3: memref<1x128xf32, #tpu.memory_space<vmem>>, %arg4: memref<128x128xbf16, #tpu.memory_space<vmem>>, %arg5: memref<1x128xf32, #tpu.memory_space<vmem>>, %arg6: memref<128x8xbf16, #tpu.memory_space<vmem>>, %arg7: memref<1x8xf32, #tpu.memory_space<vmem>>, %arg8: memref<160x8xf32, #tpu.memory_space<vmem>>) attributes {dimension_semantics = [#tpu.dimension_semantics<parallel>], iteration_bounds = array<i64: 2>, scalar_prefetch = 0 : i64, scratch_operands = 0 : i64, tpu.core_type = #tpu.core_type<tc>, window_params = [{transform_indices = @transform_0, window_bounds = array<i64: 160, 32>}, {pipeline_mode = #tpu.pipeline_mode<synchronous>, transform_indices = @transform_1, window_bounds = array<i64: 32, 128>}, {pipeline_mode = #tpu.pipeline_mode<synchronous>, transform_indices = @transform_2, window_bounds = array<i64: 1, 128>}, {pipeline_mode = #tpu.pipeline_mode<synchronous>, transform_indices = @transform_3, window_bounds = array<i64: 128, 128>}, {pipeline_mode = #tpu.pipeline_mode<synchronous>, transform_indices = @transform_4, window_bounds = array<i64: 1, 128>}, {pipeline_mode = #tpu.pipeline_mode<synchronous>, transform_indices = @transform_5, window_bounds = array<i64: 128, 8>}, {pipeline_mode = #tpu.pipeline_mode<synchronous>, transform_indices = @transform_6, window_bounds = array<i64: 1, 8>}, {transform_indices = @transform_7, window_bounds = array<i64: 160, 8>}]} {
    %c0 = arith.constant 0 : index
    %c0_0 = arith.constant 0 : index
    %0 = vector.load %arg1[%c0, %c0_0] : memref<160x32xf32, #tpu.memory_space<vmem>>, vector<160x32xf32>
    %1 = arith.truncf %0 : vector<160x32xf32> to vector<160x32xbf16>
    %c0_1 = arith.constant 0 : index
    %c0_2 = arith.constant 0 : index
    %2 = vector.load %arg2[%c0_1, %c0_2] : memref<32x128xbf16, #tpu.memory_space<vmem>>, vector<32x128xbf16>
    %cst = arith.constant dense<0.000000e+00> : vector<160x128xf32>
    %3 = tpu.matmul %1, %2, %cst {dimension_numbers = #tpu.dot_dimension_numbers<[1], [0], [0], [1], [0, 0, 1, 1], [], []>} : vector<160x32xbf16>, vector<32x128xbf16>, vector<160x128xf32> -> vector<160x128xf32>
    %c0_3 = arith.constant 0 : index
    %c0_4 = arith.constant 0 : index
    %4 = vector.load %arg3[%c0_3, %c0_4] : memref<1x128xf32, #tpu.memory_space<vmem>>, vector<1x128xf32>
    %5 = vector.broadcast %4 : vector<1x128xf32> to vector<160x128xf32>
    %6 = arith.addf %3, %5 : vector<160x128xf32>
    %7 = math.tanh %6 : vector<160x128xf32>
    %8 = arith.truncf %7 : vector<160x128xf32> to vector<160x128xbf16>
    %c0_5 = arith.constant 0 : index
    %c0_6 = arith.constant 0 : index
    %9 = vector.load %arg4[%c0_5, %c0_6] : memref<128x128xbf16, #tpu.memory_space<vmem>>, vector<128x128xbf16>
    %cst_7 = arith.constant dense<0.000000e+00> : vector<160x128xf32>
    %10 = tpu.matmul %8, %9, %cst_7 {dimension_numbers = #tpu.dot_dimension_numbers<[1], [0], [0], [1], [0, 0, 1, 1], [], []>} : vector<160x128xbf16>, vector<128x128xbf16>, vector<160x128xf32> -> vector<160x128xf32>
    %c0_8 = arith.constant 0 : index
    %c0_9 = arith.constant 0 : index
    %11 = vector.load %arg5[%c0_8, %c0_9] : memref<1x128xf32, #tpu.memory_space<vmem>>, vector<1x128xf32>
    %12 = vector.broadcast %11 : vector<1x128xf32> to vector<160x128xf32>
    %13 = arith.addf %10, %12 : vector<160x128xf32>
    %14 = math.tanh %13 : vector<160x128xf32>
    %15 = arith.truncf %14 : vector<160x128xf32> to vector<160x128xbf16>
    %c0_10 = arith.constant 0 : index
    %c0_11 = arith.constant 0 : index
    %16 = vector.load %arg6[%c0_10, %c0_11] : memref<128x8xbf16, #tpu.memory_space<vmem>>, vector<128x8xbf16>
    %cst_12 = arith.constant dense<0.000000e+00> : vector<160x8xf32>
    %17 = tpu.matmul %15, %16, %cst_12 {dimension_numbers = #tpu.dot_dimension_numbers<[1], [0], [0], [1], [0, 0, 1, 1], [], []>} : vector<160x128xbf16>, vector<128x8xbf16>, vector<160x8xf32> -> vector<160x8xf32>
    %c0_13 = arith.constant 0 : index
    %c0_14 = arith.constant 0 : index
    %18 = vector.load %arg7[%c0_13, %c0_14] : memref<1x8xf32, #tpu.memory_space<vmem>>, vector<1x8xf32>
    %19 = vector.broadcast %18 : vector<1x8xf32> to vector<160x8xf32>
    %20 = arith.addf %17, %19 : vector<160x8xf32>
    %c0_15 = arith.constant 0 : index
    %c0_16 = arith.constant 0 : index
    %21 = vector.load %arg8[%c0_15, %c0_16] : memref<160x8xf32, #tpu.memory_space<vmem>>, vector<160x8xf32>
    tpu.vector_store %arg8[%c0_15, %c0_16], %20 {strides = array<i32>} : memref<160x8xf32, #tpu.memory_space<vmem>>, vector<160x8xf32>,
    return
  }
  func.func @transform_0(%arg0: i32) -> (i32, i32) {
    %c0_i32 = arith.constant 0 : i32
    %c0_i32_0 = arith.constant 0 : i32
    return %arg0, %c0_i32 : i32, i32
  }
  func.func @transform_1(%arg0: i32) -> (i32, i32) {
    %c0_i32 = arith.constant 0 : i32
    %c0_i32_0 = arith.constant 0 : i32
    %c0_i32_1 = arith.constant 0 : i32
    return %c0_i32, %c0_i32_0 : i32, i32
  }
  func.func @transform_2(%arg0: i32) -> (i32, i32) {
    %c0_i32 = arith.constant 0 : i32
    %c0_i32_0 = arith.constant 0 : i32
    %c0_i32_1 = arith.constant 0 : i32
    return %c0_i32, %c0_i32_0 : i32, i32
  }
  func.func @transform_3(%arg0: i32) -> (i32, i32) {
    %c0_i32 = arith.constant 0 : i32
    %c0_i32_0 = arith.constant 0 : i32
    %c0_i32_1 = arith.constant 0 : i32
    return %c0_i32, %c0_i32_0 : i32, i32
  }
  func.func @transform_4(%arg0: i32) -> (i32, i32) {
    %c0_i32 = arith.constant 0 : i32
    %c0_i32_0 = arith.constant 0 : i32
    %c0_i32_1 = arith.constant 0 : i32
    return %c0_i32, %c0_i32_0 : i32, i32
  }
  func.func @transform_5(%arg0: i32) -> (i32, i32) {
    %c0_i32 = arith.constant 0 : i32
    %c0_i32_0 = arith.constant 0 : i32
    %c0_i32_1 = arith.constant 0 : i32
    return %c0_i32, %c0_i32_0 : i32, i32
  }
  func.func @transform_6(%arg0: i32) -> (i32, i32) {
    %c0_i32 = arith.constant 0 : i32
    %c0_i32_0 = arith.constant 0 : i32
    %c0_i32_1 = arith.constant 0 : i32
    return %c0_i32, %c0_i32_0 : i32, i32
  }
  func.func @transform_7(%arg0: i32) -> (i32, i32) {
    %c0_i32 = arith.constant 0 : i32
    %c0_i32_0 = arith.constant 0 : i32
    return %arg0, %c0_i32 : i32, i32
  }
}

</mosaic_0001>

<llo_original>
// kernel: tpu_custom_call.1
$region0: #{tpu_custom_call.1}
  #allocation0 [shape = 'u32[]', space=smem, size = 0x4, offset = 0x4, fixed_abs, tag = 'smem constant byte address 0x4 - core index']
  #allocation1 [shape = 'u32[72,128]{1,0:T(1,128)}', space=vmem, size = 0x9000, scoped, tag = 'internal scratch']
  %s0 = inlined_call_operand.vmem [shape: f32[320,32], index: 0, kind: input, shape index: {}]
  %s1 = inlined_call_operand.vmem [shape: bf16[32,128], index: 1, kind: input, shape index: {}]
  %s2 = inlined_call_operand.vmem [shape: f32[1,128], index: 2, kind: input, shape index: {}]
  %s3 = inlined_call_operand.vmem [shape: bf16[128,128], index: 3, kind: input, shape index: {}]
  %s4 = inlined_call_operand.vmem [shape: f32[1,128], index: 4, kind: input, shape index: {}]
  %s5 = inlined_call_operand.vmem [shape: bf16[128,8], index: 5, kind: input, shape index: {}]
  %s6 = inlined_call_operand.vmem [shape: f32[1,8], index: 6, kind: input, shape index: {}]
  %s7 = inlined_call_operand.vmem [shape: f32[320,8], index: 7, kind: output, shape index: {}]
  %s8 = sld [smem:[#allocation0]]
  $region61: #{tpu_custom_call.1} parent=0
    _
  %s10 = ssub.s32 1, %s8
  %s11 = scalar_select 0, %s10, %s8
  loop: start=0, step=1, limit=4
  $region2: #{tpu_custom_call.1} parent=0 // loop_pre_header
    _
  $region3: #{tpu_custom_call.1} parent=0 // loop_header
    %s13 = sphi 0, %s17
    %p14 = scmp.ge.s32.totalorder %s13, 4
    %s23 = sphi 0, %s25
    %s26 = sphi 0, %s23
    %s27 = sphi 0, %s26
    %s43 = sphi 0, %s27
    %s47 = sphi 0, %s47
    %s49 = sphi 0, %s47
    %s50 = sphi 0, %s49
    %s64 = sphi 0, %s50
    %s68 = sphi 0, %s68
    %s70 = sphi 0, %s68
    %s71 = sphi 0, %s70
    %s85 = sphi 0, %s71
    %s89 = sphi 0, %s89
    %s91 = sphi 0, %s89
    %s92 = sphi 0, %s91
    %s106 = sphi 0, %s92
    %s110 = sphi 0, %s110
    %s112 = sphi 0, %s110
    %s113 = sphi 0, %s112
    %s127 = sphi 0, %s113
    %s131 = sphi 0, %s131
    %s133 = sphi 0, %s131
    %s134 = sphi 0, %s133
    %s148 = sphi 0, %s134
    %s152 = sphi 0, %s152
    %s154 = sphi 0, %s152
    %s155 = sphi 0, %s154
    %s169 = sphi 0, %s155
    %s175 = sphi 0, %s177
    %s178 = sphi 0, %s175
    %s179 = sphi 0, %s178
    %s195 = sphi 0, %s179
  $region4: #{tpu_custom_call.1} parent=0 // loop_header_branch
    %16 = sbr.rel (%p14) target = $region8
  $region5: #{tpu_custom_call.1} parent=0 // loop_body
    %s18 = ssub.s32 %s13, 1
    %s19 = ssub.s32 %s13, 2
    %s20 = sadd.s32 %s13, 1
    %s21 = ssub.s32 %s13, %s20
    %p22 = scmp.eq.s32.totalorder %s21, 0
    %s24 = sadd.s32 %s23, 1
    %s25 = scalar_select %p22, %s23, %s24
    %p28 = pneg %p22
    %p29 = scmp.eq.s32.totalorder %s13, 1
    %p30 = por %p28, %p29
    %p31 = scmp.ne.s32.totalorder %s23, %s26
    %p32 = scmp.eq.s32.totalorder %s13, 0
    %p33 = por %p31, %p32
    %p34 = scmp.ne.s32.totalorder %s23, %s26
    %p35 = scmp.eq.s32.totalorder %s18, 1
    %p36 = por %p34, %p35
    %p37 = scmp.ne.s32.totalorder %s26, %s27
    %p38 = scmp.eq.s32.totalorder %s18, 0
    %p39 = por %p37, %p38
    %p40 = scmp.ne.s32.totalorder %s26, %s27
    %p41 = scmp.eq.s32.totalorder %s19, 1
    %p42 = por %p40, %p41
    %p44 = scmp.ne.s32.totalorder %s27, %s43
    %p45 = scmp.eq.s32.totalorder %s19, 0
    %p46 = por %p44, %p45
    %s48 = sadd.s32 %s47, 1
    %p51 = scmp.eq.s32.totalorder %s13, 1
    %p52 = scmp.ne.s32.totalorder %s47, %s49
    %p53 = scmp.eq.s32.totalorder %s13, 0
    %p54 = por %p52, %p53
    %p55 = scmp.ne.s32.totalorder %s47, %s49
    %p56 = scmp.eq.s32.totalorder %s18, 1
    %p57 = por %p55, %p56
    %p58 = scmp.ne.s32.totalorder %s49, %s50
    %p59 = scmp.eq.s32.totalorder %s18, 0
    %p60 = por %p58, %p59
    %p61 = scmp.ne.s32.totalorder %s49, %s50
    %p62 = scmp.eq.s32.totalorder %s19, 1
    %p63 = por %p61, %p62
    %p65 = scmp.ne.s32.totalorder %s50, %s64
    %p66 = scmp.eq.s32.totalorder %s19, 0
    %p67 = por %p65, %p66
    %s69 = sadd.s32 %s68, 1
    %p72 = scmp.eq.s32.totalorder %s13, 1
    %p73 = scmp.ne.s32.totalorder %s68, %s70
    %p74 = scmp.eq.s32.totalorder %s13, 0
    %p75 = por %p73, %p74
    %p76 = scmp.ne.s32.totalorder %s68, %s70
    %p77 = scmp.eq.s32.totalorder %s18, 1
    %p78 = por %p76, %p77
    %p79 = scmp.ne.s32.totalorder %s70, %s71
    %p80 = scmp.eq.s32.totalorder %s18, 0
    %p81 = por %p79, %p80
    %p82 = scmp.ne.s32.totalorder %s70, %s71
    %p83 = scmp.eq.s32.totalorder %s19, 1
    %p84 = por %p82, %p83
    %p86 = scmp.ne.s32.totalorder %s71, %s85
    %p87 = scmp.eq.s32.totalorder %s19, 0
    %p88 = por %p86, %p87
    %s90 = sadd.s32 %s89, 1
    %p93 = scmp.eq.s32.totalorder %s13, 1
    %p94 = scmp.ne.s32.totalorder %s89, %s91
    %p95 = scmp.eq.s32.totalorder %s13, 0
    %p96 = por %p94, %p95
    %p97 = scmp.ne.s32.totalorder %s89, %s91
    %p98 = scmp.eq.s32.totalorder %s18, 1
    %p99 = por %p97, %p98
    %p100 = scmp.ne.s32.totalorder %s91, %s92
    %p101 = scmp.eq.s32.totalorder %s18, 0
    %p102 = por %p100, %p101
    %p103 = scmp.ne.s32.totalorder %s91, %s92
    %p104 = scmp.eq.s32.totalorder %s19, 1
    %p105 = por %p103, %p104
    %p107 = scmp.ne.s32.totalorder %s92, %s106
    %p108 = scmp.eq.s32.totalorder %s19, 0
    %p109 = por %p107, %p108
    %s111 = sadd.s32 %s110, 1
    %p114 = scmp.eq.s32.totalorder %s13, 1
    %p115 = scmp.ne.s32.totalorder %s110, %s112
    %p116 = scmp.eq.s32.totalorder %s13, 0
    %p117 = por %p115, %p116
    %p118 = scmp.ne.s32.totalorder %s110, %s112
    %p119 = scmp.eq.s32.totalorder %s18, 1
    %p120 = por %p118, %p119
    %p121 = scmp.ne.s32.totalorder %s112, %s113
    %p122 = scmp.eq.s32.totalorder %s18, 0
    %p123 = por %p121, %p122
    %p124 = scmp.ne.s32.totalorder %s112, %s113
    %p125 = scmp.eq.s32.totalorder %s19, 1
    %p126 = por %p124, %p125
    %p128 = scmp.ne.s32.totalorder %s113, %s127
    %p129 = scmp.eq.s32.totalorder %s19, 0
    %p130 = por %p128, %p129
    %s132 = sadd.s32 %s131, 1
    %p135 = scmp.eq.s32.totalorder %s13, 1
    %p136 = scmp.ne.s32.totalorder %s131, %s133
    %p137 = scmp.eq.s32.totalorder %s13, 0
    %p138 = por %p136, %p137
    %p139 = scmp.ne.s32.totalorder %s131, %s133
    %p140 = scmp.eq.s32.totalorder %s18, 1
    %p141 = por %p139, %p140
    %p142 = scmp.ne.s32.totalorder %s133, %s134
    %p143 = scmp.eq.s32.totalorder %s18, 0
    %p144 = por %p142, %p143
    %p145 = scmp.ne.s32.totalorder %s133, %s134
    %p146 = scmp.eq.s32.totalorder %s19, 1
    %p147 = por %p145, %p146
    %p149 = scmp.ne.s32.totalorder %s134, %s148
    %p150 = scmp.eq.s32.totalorder %s19, 0
    %p151 = por %p149, %p150
    %s153 = sadd.s32 %s152, 1
    %p156 = scmp.eq.s32.totalorder %s13, 1
    %p157 = scmp.ne.s32.totalorder %s152, %s154
    %p158 = scmp.eq.s32.totalorder %s13, 0
    %p159 = por %p157, %p158
    %p160 = scmp.ne.s32.totalorder %s152, %s154
    %p161 = scmp.eq.s32.totalorder %s18, 1
    %p162 = por %p160, %p161
    %p163 = scmp.ne.s32.totalorder %s154, %s155
    %p164 = scmp.eq.s32.totalorder %s18, 0
    %p165 = por %p163, %p164
    %p166 = scmp.ne.s32.totalorder %s154, %s155
    %p167 = scmp.eq.s32.totalorder %s19, 1
    %p168 = por %p166, %p167
    %p170 = scmp.ne.s32.totalorder %s155, %s169
    %p171 = scmp.eq.s32.totalorder %s19, 0
    %p172 = por %p170, %p171
    %s173 = ssub.s32 %s13, %s20
    %p174 = scmp.eq.s32.totalorder %s173, 0
    %s176 = sadd.s32 %s175, 1
    %s177 = scalar_select %p174, %s175, %s176
    %p180 = pneg %p174
    %p181 = scmp.eq.s32.totalorder %s13, 1
    %p182 = por %p180, %p181
    %p183 = scmp.ne.s32.totalorder %s175, %s178
    %p184 = scmp.eq.s32.totalorder %s13, 0
    %p185 = por %p183, %p184
    %p186 = scmp.ne.s32.totalorder %s175, %s178
    %p187 = scmp.eq.s32.totalorder %s18, 1
    %p188 = por %p186, %p187
    %p189 = scmp.ne.s32.totalorder %s178, %s179
    %p190 = scmp.eq.s32.totalorder %s18, 0
    %p191 = por %p189, %p190
    %p192 = scmp.ne.s32.totalorder %s178, %s179
    %p193 = scmp.eq.s32.totalorder %s19, 1
    %p194 = por %p192, %p193
    %p196 = scmp.ne.s32.totalorder %s179, %s195
    %p197 = scmp.eq.s32.totalorder %s19, 0
    %p198 = por %p196, %p197
    %p199 = scmp.le.s32.totalorder 1, %s13
    %p200 = scmp.lt.s32.totalorder %s13, 3
    %p201 = pnand %p199, %p200
    %p202 = pneg %p201
    // Predicated region
    $region9: #{tpu_custom_call.1} parent=5 // pred_check
      _
    $region10: #{tpu_custom_call.1} parent=5 // pred_check_branch
      %204 = sbr.rel (%p201) target = $region12
    $region11: #{tpu_custom_call.1} parent=5 // pred_region
      %s205 = ssub.s32 %s13, 1
      // Predicated region
      $region13: #{tpu_custom_call.1} parent=11 // pred_check
        %p206 = pneg %p60
      $region14: #{tpu_custom_call.1} parent=11 // pred_check_branch
        %208 = sbr.rel (%p206) target = $region16
      $region15: #{tpu_custom_call.1} parent=11 // pred_region
        _
      $region16: #{tpu_custom_call.1} parent=11 // pred_fallthru
        _
      // Predicated region
      $region17: #{tpu_custom_call.1} parent=11 // pred_check
        %p209 = pneg %p81
      $region18: #{tpu_custom_call.1} parent=11 // pred_check_branch
        %211 = sbr.rel (%p209) target = $region20
      $region19: #{tpu_custom_call.1} parent=11 // pred_region
        _
      $region20: #{tpu_custom_call.1} parent=11 // pred_fallthru
        _
      // Predicated region
      $region21: #{tpu_custom_call.1} parent=11 // pred_check
        %p212 = pneg %p102
      $region22: #{tpu_custom_call.1} parent=11 // pred_check_branch
        %214 = sbr.rel (%p212) target = $region24
      $region23: #{tpu_custom_call.1} parent=11 // pred_region
        _
      $region24: #{tpu_custom_call.1} parent=11 // pred_fallthru
        _
      // Predicated region
      $region25: #{tpu_custom_call.1} parent=11 // pred_check
        %p215 = pneg %p123
      $region26: #{tpu_custom_call.1} parent=11 // pred_check_branch
        %217 = sbr.rel (%p215) target = $region28
      $region27: #{tpu_custom_call.1} parent=11 // pred_region
        _
      $region28: #{tpu_custom_call.1} parent=11 // pred_fallthru
        _
      // Predicated region
      $region29: #{tpu_custom_call.1} parent=11 // pred_check
        %p218 = pneg %p144
      $region30: #{tpu_custom_call.1} parent=11 // pred_check_branch
        %220 = sbr.rel (%p218) target = $region32
      $region31: #{tpu_custom_call.1} parent=11 // pred_region
        _
      $region32: #{tpu_custom_call.1} parent=11 // pred_fallthru
        _
      // Predicated region
      $region33: #{tpu_custom_call.1} parent=11 // pred_check
        %p221 = pneg %p165
      $region34: #{tpu_custom_call.1} parent=11 // pred_check_branch
        %223 = sbr.rel (%p221) target = $region36
      $region35: #{tpu_custom_call.1} parent=11 // pred_region
        _
      $region36: #{tpu_custom_call.1} parent=11 // pred_fallthru
        _
    $region12: #{tpu_custom_call.1} parent=5 // pred_fallthru
      _
    %p224 = scmp.lt.s32.totalorder %s13, 2
    // Predicated region
    $region37: #{tpu_custom_call.1} parent=5 // pred_check
      %p225 = pneg %p224
    $region38: #{tpu_custom_call.1} parent=5 // pred_check_branch
      %227 = sbr.rel (%p225) target = $region40
    $region39: #{tpu_custom_call.1} parent=5 // pred_region
      // Predicated region
      $region41: #{tpu_custom_call.1} parent=39 // pred_check
        %p228 = pneg %p33
      $region42: #{tpu_custom_call.1} parent=39 // pred_check_branch
        %230 = sbr.rel (%p228) target = $region44
      $region43: #{tpu_custom_call.1} parent=39 // pred_region
        %s231 = smul.u32 20, %s13
        %p232 = scmp.lt.s32.totalorder %s231, 39
        %s233 = scalar_select %p232, %s231, 39
        %s234 = smul.addr %s233, 8
        %s235 = scalar_lea.vmem %s0, %s234
        %s236 = smul.u32 20, %s13
      $region44: #{tpu_custom_call.1} parent=39 // pred_fallthru
        _
    $region40: #{tpu_custom_call.1} parent=5 // pred_fallthru
      _
    %p237 = scmp.le.s32.totalorder 1, %s13
    %p238 = scmp.lt.s32.totalorder %s13, 3
    %p239 = pnand %p237, %p238
    %p240 = pneg %p239
    // Predicated region
    $region45: #{tpu_custom_call.1} parent=5 // pred_check
      _
    $region46: #{tpu_custom_call.1} parent=5 // pred_check_branch
      %242 = sbr.rel (%p239) target = $region48
    $region47: #{tpu_custom_call.1} parent=5 // pred_region
      %s243 = ssub.s32 %s13, 1
      %s244 = smul.u32 20, %s18
      %p245 = scmp.lt.s32.totalorder %s244, 39
      %s246 = scalar_select %p245, %s244, 39
      %s247 = smul.addr %s246, 8
      %s248 = scalar_lea.vmem %s0, %s247
      %p249 = pneg %p39
      %p250 = pneg %p36
      %p251 = pneg %p60
      %p252 = pneg %p57
      %p253 = pneg %p81
      %p254 = pneg %p78
      %p255 = pneg %p102
      %p256 = pneg %p99
      %p257 = pneg %p123
      %p258 = pneg %p120
      %p259 = pneg %p144
      %p260 = pneg %p141
      %p261 = pneg %p165
      %p262 = pneg %p162
      %p263 = pneg %p191
      %p264 = pneg %p188
      %s265 = smul.u32 20, %s18
      %p266 = scmp.lt.s32.totalorder %s265, 39
      %s267 = scalar_select %p266, %s265, 39
      %s268 = smul.addr %s267, 8
      %s269 = scalar_lea.vmem %s7, %s268
      %s270 = smul.u32 20, %s18
      %p271 = scmp.lt.s32.totalorder %s270, 39
      %s272 = scalar_select %p271, %s270, 39
      %s273 = smul.addr %s272, 8
      %s274 = scalar_lea.vmem %s0, %s273
      %s275 = smul.u32 20, %s18
      %s276 = smul.u32 20, %s18
      %p277 = scmp.lt.s32.totalorder %s276, 39
      %s278 = scalar_select %p277, %s276, 39
      %s279 = smul.addr %s278, 8
      %s280 = scalar_lea.vmem %s7, %s279
      %s281 = smul.u32 20, %s18
      %v283 = vld [vmem:[%s274] sm:$0xff]
      %v284 = vld [vmem:[%s274 + $0x8] sm:$0xff]
      %v285 = vld [vmem:[%s274 + $0x10] sm:$0xff]
      %v286 = vld [vmem:[%s274 + $0x18] sm:$0xff]
      %v287 = vld [vmem:[%s274 + $0x20] sm:$0xff]
      %v288 = vld [vmem:[%s274 + $0x28] sm:$0xff]
      %v289 = vld [vmem:[%s274 + $0x30] sm:$0xff]
      %v290 = vld [vmem:[%s274 + $0x38] sm:$0xff]
      %v291 = vld [vmem:[%s274 + $0x40] sm:$0xff]
      %v292 = vld [vmem:[%s274 + $0x48] sm:$0xff]
      %v293 = vld [vmem:[%s274 + $0x50] sm:$0xff]
      %v294 = vld [vmem:[%s274 + $0x58] sm:$0xff]
      %v295 = vld [vmem:[%s274 + $0x60] sm:$0xff]
      %v296 = vld [vmem:[%s274 + $0x68] sm:$0xff]
      %v297 = vld [vmem:[%s274 + $0x70] sm:$0xff]
      %v298 = vld [vmem:[%s274 + $0x78] sm:$0xff]
      %v299 = vld [vmem:[%s274 + $0x80] sm:$0xff]
      %v300 = vld [vmem:[%s274 + $0x88] sm:$0xff]
      %v301 = vld [vmem:[%s274 + $0x90] sm:$0xff]
      %v302 = vld [vmem:[%s274 + $0x98] sm:$0xff]
      %v303 = vpack.c.bf16 %v284, %v283
      %v304 = vpack.c.bf16 %v286, %v285
      %v305 = vpack.c.bf16 %v288, %v287
      %v306 = vpack.c.bf16 %v290, %v289
      %v307 = vpack.c.bf16 %v292, %v291
      %v308 = vpack.c.bf16 %v294, %v293
      %v309 = vpack.c.bf16 %v296, %v295
      %v310 = vpack.c.bf16 %v298, %v297
      %v311 = vpack.c.bf16 %v300, %v299
      %v312 = vpack.c.bf16 %v302, %v301
      %v313 = vld [vmem:[%s1] sm:$0xf]
      %v314 = vld [vmem:[%s1 + $0x4] sm:$0xf]
      %v315 = vld [vmem:[%s1 + $0x8] sm:$0xf]
      %v316 = vld [vmem:[%s1 + $0xc] sm:$0xf]
      %v317 = vld [vmem:[%s2] sm:$0x1]
      %v319 = vperm.slane %v317, 0
      %v325 = vunpack.c.l.b16 %v313
      %v326 = vunpack.c.l.b16 %v314
      %v327 = vunpack.c.l.b16 %v315
      %v328 = vunpack.c.l.b16 %v316
      %v329 = vpack.c.b16 %v326, %v325
      %v330 = vpack.c.b16 %v328, %v327
      %vm333 = vcmask 261120
      %v335 = vsel %vm333, %v303, 0
      %v338 = vsel %vm333, %v304, 0
      %v341 = vsel %vm333, %v305, 0
      %v344 = vsel %vm333, %v306, 0
      %v347 = vsel %vm333, %v307, 0
      %v350 = vsel %vm333, %v308, 0
      %v353 = vsel %vm333, %v309, 0
      %v356 = vsel %vm333, %v310, 0
      %v359 = vsel %vm333, %v311, 0
      %v362 = vsel %vm333, %v312, 0
      %364 = vmatpush.bf16.msra.mxu0 0
      %365 = vmatpush.bf16.msra.mxu0 0
      %366 = vmatpush.bf16.msra.mxu0 0
      %367 = vmatpush.bf16.msra.mxu0 0
      %368 = vmatpush.bf16.msra.mxu0 0
      %369 = vmatpush.bf16.msra.mxu0 0
      %370 = vmatpush.bf16.msra.mxu0 %v330
      %371 = vmatpush.bf16.msra.mxu0 %v329
      %372 = vmatmul.bf16.gmra.mxu0 %v335
      %v373 = vpop.f32.mrf.mxu0
      %v374 = vadd.f32 %v319, %v373
      %v375 = vpop.f32.mrf.mxu0
      %v376 = vadd.f32 %v319, %v375
      %377 = vmatmul.bf16.gmra.mxu0 %v338
      %v378 = vpop.f32.mrf.mxu0
      %v379 = vadd.f32 %v319, %v378
      %v380 = vpop.f32.mrf.mxu0
      %v381 = vadd.f32 %v319, %v380
      %382 = vmatmul.bf16.gmra.mxu0 %v341
      %v383 = vpop.f32.mrf.mxu0
      %v384 = vadd.f32 %v319, %v383
      %v385 = vpop.f32.mrf.mxu0
      %v386 = vadd.f32 %v319, %v385
      %387 = vmatmul.bf16.gmra.mxu0 %v344
      %v388 = vpop.f32.mrf.mxu0
      %v389 = vadd.f32 %v319, %v388
      %v390 = vpop.f32.mrf.mxu0
      %v391 = vadd.f32 %v319, %v390
      %392 = vmatmul.bf16.gmra.mxu0 %v347
      %v393 = vpop.f32.mrf.mxu0
      %v394 = vadd.f32 %v319, %v393
      %v395 = vpop.f32.mrf.mxu0
      %v396 = vadd.f32 %v319, %v395
      %397 = vmatmul.bf16.gmra.mxu0 %v350
      %v398 = vpop.f32.mrf.mxu0
      %v399 = vadd.f32 %v319, %v398
      %v400 = vpop.f32.mrf.mxu0
      %v401 = vadd.f32 %v319, %v400
      %402 = vmatmul.bf16.gmra.mxu0 %v353
      %v403 = vpop.f32.mrf.mxu0
      %v404 = vadd.f32 %v319, %v403
      %v405 = vpop.f32.mrf.mxu0
      %v406 = vadd.f32 %v319, %v405
      %407 = vmatmul.bf16.gmra.mxu0 %v356
      %v408 = vpop.f32.mrf.mxu0
      %v409 = vadd.f32 %v319, %v408
      %v410 = vpop.f32.mrf.mxu0
      %v411 = vadd.f32 %v319, %v410
      %412 = vmatmul.bf16.gmra.mxu0 %v359
      %v413 = vpop.f32.mrf.mxu0
      %v414 = vadd.f32 %v319, %v413
      %v415 = vpop.f32.mrf.mxu0
      %v416 = vadd.f32 %v319, %v415
      %417 = vmatmul.bf16.gmra.mxu0 %v362
      %v418 = vpop.f32.mrf.mxu0
      %v419 = vadd.f32 %v319, %v418
      %v420 = vpop.f32.mrf.mxu0
      %v421 = vadd.f32 %v319, %v420
      %422 = vdwg.mxu0
      %v423 = vtanh.pop %v374
      %v424 = vtanh.pop %v376
      %v425 = vtanh.pop %v379
      %v426 = vtanh.pop %v381
      %v427 = vtanh.pop %v384
      %v428 = vtanh.pop %v386
      %v429 = vtanh.pop %v389
      %v430 = vtanh.pop %v391
      %v431 = vtanh.pop %v394
      %v432 = vtanh.pop %v396
      %v433 = vtanh.pop %v399
      %v434 = vtanh.pop %v401
      %v435 = vtanh.pop %v404
      %v436 = vtanh.pop %v406
      %v437 = vtanh.pop %v409
      %v438 = vtanh.pop %v411
      %v439 = vtanh.pop %v414
      %v440 = vtanh.pop %v416
      %v441 = vtanh.pop %v419
      %v442 = vtanh.pop %v421
      %v443 = vpack.c.bf16 %v424, %v423
      %v444 = vpack.c.bf16 %v426, %v425
      %v445 = vpack.c.bf16 %v428, %v427
      %v446 = vpack.c.bf16 %v430, %v429
      %v447 = vpack.c.bf16 %v432, %v431
      %v448 = vpack.c.bf16 %v434, %v433
      %v449 = vpack.c.bf16 %v436, %v435
      %v450 = vpack.c.bf16 %v438, %v437
      %v451 = vpack.c.bf16 %v440, %v439
      %v452 = vpack.c.bf16 %v442, %v441
      %v453 = vld [vmem:[%s3] sm:$0xf]
      %v454 = vld [vmem:[%s3 + $0x4] sm:$0xf]
      %v455 = vld [vmem:[%s3 + $0x8] sm:$0xf]
      %v456 = vld [vmem:[%s3 + $0xc] sm:$0xf]
      %v457 = vld [vmem:[%s3 + $0x10] sm:$0xf]
      %v458 = vld [vmem:[%s3 + $0x14] sm:$0xf]
      %v459 = vld [vmem:[%s3 + $0x18] sm:$0xf]
      %v460 = vld [vmem:[%s3 + $0x1c] sm:$0xf]
      %v461 = vld [vmem:[%s3 + $0x20] sm:$0xf]
      %v462 = vld [vmem:[%s3 + $0x24] sm:$0xf]
      %v463 = vld [vmem:[%s3 + $0x28] sm:$0xf]
      %v464 = vld [vmem:[%s3 + $0x2c] sm:$0xf]
      %v465 = vld [vmem:[%s3 + $0x30] sm:$0xf]
      %v466 = vld [vmem:[%s3 + $0x34] sm:$0xf]
      %v467 = vld [vmem:[%s3 + $0x38] sm:$0xf]
      %v468 = vld [vmem:[%s3 + $0x3c] sm:$0xf]
      %v469 = vld [vmem:[%s4] sm:$0x1]
      %v471 = vperm.slane %v469, 0
      %v489 = vunpack.c.l.b16 %v453
      %v490 = vunpack.c.l.b16 %v454
      %v491 = vunpack.c.l.b16 %v455
      %v492 = vunpack.c.l.b16 %v456
      %v493 = vunpack.c.l.b16 %v457
      %v494 = vunpack.c.l.b16 %v458
      %v495 = vunpack.c.l.b16 %v459
      %v496 = vunpack.c.l.b16 %v460
      %v497 = vunpack.c.l.b16 %v461
      %v498 = vunpack.c.l.b16 %v462
      %v499 = vunpack.c.l.b16 %v463
      %v500 = vunpack.c.l.b16 %v464
      %v501 = vunpack.c.l.b16 %v465
      %v502 = vunpack.c.l.b16 %v466
      %v503 = vunpack.c.l.b16 %v467
      %v504 = vunpack.c.l.b16 %v468
      %v505 = vpack.c.b16 %v490, %v489
      %v506 = vpack.c.b16 %v492, %v491
      %v507 = vpack.c.b16 %v494, %v493
      %v508 = vpack.c.b16 %v496, %v495
      %v509 = vpack.c.b16 %v498, %v497
      %v510 = vpack.c.b16 %v500, %v499
      %v511 = vpack.c.b16 %v502, %v501
      %v512 = vpack.c.b16 %v504, %v503
      %521 = vmatpush.bf16.msra.mxu0 %v512
      %522 = vmatpush.bf16.msra.mxu0 %v511
      %523 = vmatpush.bf16.msra.mxu0 %v510
      %524 = vmatpush.bf16.msra.mxu0 %v509
      %525 = vmatpush.bf16.msra.mxu0 %v508
      %526 = vmatpush.bf16.msra.mxu0 %v507
      %527 = vmatpush.bf16.msra.mxu0 %v506
      %528 = vmatpush.bf16.msra.mxu0 %v505
      %529 = vmatmul.bf16.gmra.mxu0 %v443
      %v530 = vpop.f32.mrf.mxu0
      %v531 = vadd.f32 %v471, %v530
      %v532 = vpop.f32.mrf.mxu0
      %v533 = vadd.f32 %v471, %v532
      %534 = vmatmul.bf16.gmra.mxu0 %v444
      %v535 = vpop.f32.mrf.mxu0
      %v536 = vadd.f32 %v471, %v535
      %v537 = vpop.f32.mrf.mxu0
      %v538 = vadd.f32 %v471, %v537
      %539 = vmatmul.bf16.gmra.mxu0 %v445
      %v540 = vpop.f32.mrf.mxu0
      %v541 = vadd.f32 %v471, %v540
      %v542 = vpop.f32.mrf.mxu0
      %v543 = vadd.f32 %v471, %v542
      %544 = vmatmul.bf16.gmra.mxu0 %v446
      %v545 = vpop.f32.mrf.mxu0
      %v546 = vadd.f32 %v471, %v545
      %v547 = vpop.f32.mrf.mxu0
      %v548 = vadd.f32 %v471, %v547
      %549 = vmatmul.bf16.gmra.mxu0 %v447
      %v550 = vpop.f32.mrf.mxu0
      %v551 = vadd.f32 %v471, %v550
      %v552 = vpop.f32.mrf.mxu0
      %v553 = vadd.f32 %v471, %v552
      %554 = vmatmul.bf16.gmra.mxu0 %v448
      %v555 = vpop.f32.mrf.mxu0
      %v556 = vadd.f32 %v471, %v555
      %v557 = vpop.f32.mrf.mxu0
      %v558 = vadd.f32 %v471, %v557
      %559 = vmatmul.bf16.gmra.mxu0 %v449
      %v560 = vpop.f32.mrf.mxu0
      %v561 = vadd.f32 %v471, %v560
      %v562 = vpop.f32.mrf.mxu0
      %v563 = vadd.f32 %v471, %v562
      %564 = vmatmul.bf16.gmra.mxu0 %v450
      %v565 = vpop.f32.mrf.mxu0
      %v566 = vadd.f32 %v471, %v565
      %v567 = vpop.f32.mrf.mxu0
      %v568 = vadd.f32 %v471, %v567
      %569 = vmatmul.bf16.gmra.mxu0 %v451
      %v570 = vpop.f32.mrf.mxu0
      %v571 = vadd.f32 %v471, %v570
      %v572 = vpop.f32.mrf.mxu0
      %v573 = vadd.f32 %v471, %v572
      %574 = vmatmul.bf16.gmra.mxu0 %v452
      %v575 = vpop.f32.mrf.mxu0
      %v576 = vadd.f32 %v471, %v575
      %v577 = vpop.f32.mrf.mxu0
      %v578 = vadd.f32 %v471, %v577
      %579 = vdwg.mxu0
      %v580 = vtanh.pop %v531
      %v581 = vtanh.pop %v533
      %v582 = vtanh.pop %v536
      %v583 = vtanh.pop %v538
      %v584 = vtanh.pop %v541
      %v585 = vtanh.pop %v543
      %v586 = vtanh.pop %v546
      %v587 = vtanh.pop %v548
      %v588 = vtanh.pop %v551
      %v589 = vtanh.pop %v553
      %v590 = vtanh.pop %v556
      %v591 = vtanh.pop %v558
      %v592 = vtanh.pop %v561
      %v593 = vtanh.pop %v563
      %v594 = vtanh.pop %v566
      %v595 = vtanh.pop %v568
      %v596 = vtanh.pop %v571
      %v597 = vtanh.pop %v573
      %v598 = vtanh.pop %v576
      %v599 = vtanh.pop %v578
      %v600 = vpack.c.bf16 %v581, %v580
      %v601 = vpack.c.bf16 %v583, %v582
      %v602 = vpack.c.bf16 %v585, %v584
      %v603 = vpack.c.bf16 %v587, %v586
      %v604 = vpack.c.bf16 %v589, %v588
      %v605 = vpack.c.bf16 %v591, %v590
      %v606 = vpack.c.bf16 %v593, %v592
      %v607 = vpack.c.bf16 %v595, %v594
      %v608 = vpack.c.bf16 %v597, %v596
      %v609 = vpack.c.bf16 %v599, %v598
      %v610 = vld [vmem:[%s5] sm:$0xf]
      %v611 = vld [vmem:[%s5 + $0x4] sm:$0xf]
      %v612 = vld [vmem:[%s5 + $0x8] sm:$0xf]
      %v613 = vld [vmem:[%s5 + $0xc] sm:$0xf]
      %v614 = vld [vmem:[%s5 + $0x10] sm:$0xf]
      %v615 = vld [vmem:[%s5 + $0x14] sm:$0xf]
      %v616 = vld [vmem:[%s5 + $0x18] sm:$0xf]
      %v617 = vld [vmem:[%s5 + $0x1c] sm:$0xf]
      %v618 = vld [vmem:[%s5 + $0x20] sm:$0xf]
      %v619 = vld [vmem:[%s5 + $0x24] sm:$0xf]
      %v620 = vld [vmem:[%s5 + $0x28] sm:$0xf]
      %v621 = vld [vmem:[%s5 + $0x2c] sm:$0xf]
      %v622 = vld [vmem:[%s5 + $0x30] sm:$0xf]
      %v623 = vld [vmem:[%s5 + $0x34] sm:$0xf]
      %v624 = vld [vmem:[%s5 + $0x38] sm:$0xf]
      %v625 = vld [vmem:[%s5 + $0x3c] sm:$0xf]
      %v626 = vld [vmem:[%s6] sm:$0x1]
      %v628 = vperm.slane %v626, 0
      %v646 = vunpack.c.l.b16 %v610
      %v647 = vunpack.c.l.b16 %v611
      %v648 = vunpack.c.l.b16 %v612
      %v649 = vunpack.c.l.b16 %v613
      %v650 = vunpack.c.l.b16 %v614
      %v651 = vunpack.c.l.b16 %v615
      %v652 = vunpack.c.l.b16 %v616
      %v653 = vunpack.c.l.b16 %v617
      %v654 = vunpack.c.l.b16 %v618
      %v655 = vunpack.c.l.b16 %v619
      %v656 = vunpack.c.l.b16 %v620
      %v657 = vunpack.c.l.b16 %v621
      %v658 = vunpack.c.l.b16 %v622
      %v659 = vunpack.c.l.b16 %v623
      %v660 = vunpack.c.l.b16 %v624
      %v661 = vunpack.c.l.b16 %v625
      %v662 = vpack.c.b16 %v647, %v646
      %v663 = vpack.c.b16 %v649, %v648
      %v664 = vpack.c.b16 %v651, %v650
      %v665 = vpack.c.b16 %v653, %v652
      %v666 = vpack.c.b16 %v655, %v654
      %v667 = vpack.c.b16 %v657, %v656
      %v668 = vpack.c.b16 %v659, %v658
      %v669 = vpack.c.b16 %v661, %v660
      %678 = vmatpush.bf16.msra.mxu0 %v669
      %679 = vmatpush.bf16.msra.mxu0 %v668
      %680 = vmatpush.bf16.msra.mxu0 %v667
      %681 = vmatpush.bf16.msra.mxu0 %v666
      %682 = vmatpush.bf16.msra.mxu0 %v665
      %683 = vmatpush.bf16.msra.mxu0 %v664
      %684 = vmatpush.bf16.msra.mxu0 %v663
      %685 = vmatpush.bf16.msra.mxu0 %v662
      %686 = vmatmul.bf16.gmra.mxu0 %v600
      %v687 = vpop.f32.mrf.mxu0
      %v688 = vadd.f32 %v628, %v687
      %v689 = vpop.f32.mrf.mxu0
      %v690 = vadd.f32 %v628, %v689
      %691 = vmatmul.bf16.gmra.mxu0 %v601
      %v692 = vpop.f32.mrf.mxu0
      %v693 = vadd.f32 %v628, %v692
      %v694 = vpop.f32.mrf.mxu0
      %v695 = vadd.f32 %v628, %v694
      %696 = vmatmul.bf16.gmra.mxu0 %v602
      %v697 = vpop.f32.mrf.mxu0
      %v698 = vadd.f32 %v628, %v697
      %v699 = vpop.f32.mrf.mxu0
      %v700 = vadd.f32 %v628, %v699
      %701 = vmatmul.bf16.gmra.mxu0 %v603
      %v702 = vpop.f32.mrf.mxu0
      %v703 = vadd.f32 %v628, %v702
      %v704 = vpop.f32.mrf.mxu0
      %v705 = vadd.f32 %v628, %v704
      %706 = vmatmul.bf16.gmra.mxu0 %v604
      %v707 = vpop.f32.mrf.mxu0
      %v708 = vadd.f32 %v628, %v707
      %v709 = vpop.f32.mrf.mxu0
      %v710 = vadd.f32 %v628, %v709
      %711 = vmatmul.bf16.gmra.mxu0 %v605
      %v712 = vpop.f32.mrf.mxu0
      %v713 = vadd.f32 %v628, %v712
      %v714 = vpop.f32.mrf.mxu0
      %v715 = vadd.f32 %v628, %v714
      %716 = vmatmul.bf16.gmra.mxu0 %v606
      %v717 = vpop.f32.mrf.mxu0
      %v718 = vadd.f32 %v628, %v717
      %v719 = vpop.f32.mrf.mxu0
      %v720 = vadd.f32 %v628, %v719
      %721 = vmatmul.bf16.gmra.mxu0 %v607
      %v722 = vpop.f32.mrf.mxu0
      %v723 = vadd.f32 %v628, %v722
      %v724 = vpop.f32.mrf.mxu0
      %v725 = vadd.f32 %v628, %v724
      %726 = vmatmul.bf16.gmra.mxu0 %v608
      %v727 = vpop.f32.mrf.mxu0
      %v728 = vadd.f32 %v628, %v727
      %v729 = vpop.f32.mrf.mxu0
      %v730 = vadd.f32 %v628, %v729
      %731 = vmatmul.bf16.gmra.mxu0 %v609
      %v732 = vpop.f32.mrf.mxu0
      %v733 = vadd.f32 %v628, %v732
      %v734 = vpop.f32.mrf.mxu0
      %v735 = vadd.f32 %v628, %v734
      %736 = vdwg.mxu0
      %vm737 = vcmask 64512
      %738 = vst.msk [vmem:[%s280] sm:$0xff] %vm737, %v688
      %739 = vst.msk [vmem:[%s280 + $0x8] sm:$0xff] %vm737, %v690
      %740 = vst.msk [vmem:[%s280 + $0x10] sm:$0xff] %vm737, %v693
      %741 = vst.msk [vmem:[%s280 + $0x18] sm:$0xff] %vm737, %v695
      %742 = vst.msk [vmem:[%s280 + $0x20] sm:$0xff] %vm737, %v698
      %743 = vst.msk [vmem:[%s280 + $0x28] sm:$0xff] %vm737, %v700
      %744 = vst.msk [vmem:[%s280 + $0x30] sm:$0xff] %vm737, %v703
      %745 = vst.msk [vmem:[%s280 + $0x38] sm:$0xff] %vm737, %v705
      %746 = vst.msk [vmem:[%s280 + $0x40] sm:$0xff] %vm737, %v708
      %747 = vst.msk [vmem:[%s280 + $0x48] sm:$0xff] %vm737, %v710
      %748 = vst.msk [vmem:[%s280 + $0x50] sm:$0xff] %vm737, %v713
      %749 = vst.msk [vmem:[%s280 + $0x58] sm:$0xff] %vm737, %v715
      %750 = vst.msk [vmem:[%s280 + $0x60] sm:$0xff] %vm737, %v718
      %751 = vst.msk [vmem:[%s280 + $0x68] sm:$0xff] %vm737, %v720
      %752 = vst.msk [vmem:[%s280 + $0x70] sm:$0xff] %vm737, %v723
      %753 = vst.msk [vmem:[%s280 + $0x78] sm:$0xff] %vm737, %v725
      %754 = vst.msk [vmem:[%s280 + $0x80] sm:$0xff] %vm737, %v728
      %755 = vst.msk [vmem:[%s280 + $0x88] sm:$0xff] %vm737, %v730
      %756 = vst.msk [vmem:[%s280 + $0x90] sm:$0xff] %vm737, %v733
      %757 = vst.msk [vmem:[%s280 + $0x98] sm:$0xff] %vm737, %v735
      %s758 = smul.u32 20, %s18
      %p759 = scmp.lt.s32.totalorder %s758, 39
      %s760 = scalar_select %p759, %s758, 39
      %s761 = smul.addr %s760, 8
      %s762 = scalar_lea.vmem %s7, %s761
      // Predicated region
      $region49: #{tpu_custom_call.1} parent=47 // pred_check
        %p763 = pneg %p188
      $region50: #{tpu_custom_call.1} parent=47 // pred_check_branch
        %765 = sbr.rel (%p763) target = $region52
      $region51: #{tpu_custom_call.1} parent=47 // pred_region
        %s766 = smul.u32 20, %s18
      $region52: #{tpu_custom_call.1} parent=47 // pred_fallthru
        _
    $region48: #{tpu_custom_call.1} parent=5 // pred_fallthru
      _
    %p767 = scmp.le.s32.totalorder 2, %s13
    // Predicated region
    $region53: #{tpu_custom_call.1} parent=5 // pred_check
      %p768 = pneg %p767
    $region54: #{tpu_custom_call.1} parent=5 // pred_check_branch
      %770 = sbr.rel (%p768) target = $region56
    $region55: #{tpu_custom_call.1} parent=5 // pred_region
      %s771 = ssub.s32 %s13, 2
      // Predicated region
      $region57: #{tpu_custom_call.1} parent=55 // pred_check
        %p772 = pneg %p194
      $region58: #{tpu_custom_call.1} parent=55 // pred_check_branch
        %774 = sbr.rel (%p772) target = $region60
      $region59: #{tpu_custom_call.1} parent=55 // pred_region
        %s775 = smul.u32 20, %s19
        %p776 = scmp.lt.s32.totalorder %s775, 39
        %s777 = scalar_select %p776, %s775, 39
        %s778 = smul.addr %s777, 8
        %s779 = scalar_lea.vmem %s7, %s778
      $region60: #{tpu_custom_call.1} parent=55 // pred_fallthru
        _
    $region56: #{tpu_custom_call.1} parent=5 // pred_fallthru
      _
  $region6: #{tpu_custom_call.1} parent=0 // loop_footer
    %s17 = sadd.s32 1, %s13
  $region7: #{tpu_custom_call.1} parent=0 // loop_footer_branch
    %12 = sbr.rel target = $region3
  $region8: #{tpu_custom_call.1} parent=0 // loop_exit
    _

</llo_original>
